<compile_context>
chip_gen: v7x
topology: tpu7x:2x2x1
jax: 0.10.0
libtpu: 0.0.40
codegen_flags: <defaults>
</compile_context>

<pallas_src>
import functools

import jax
import jax.numpy as jnp
from jax import lax
from jax.experimental import pallas as pl
from jax.experimental.pallas import tpu as pltpu
import numpy as np


def autopad(k, p=None, d=1):
    """Pad to 'same' shape outputs (mirrors the PyTorch helper)."""
    if d > 1:
        k = d * (k - 1) + 1 if isinstance(k, int) else [d * (x - 1) + 1 for x in k]
    if p is None:
        p = k // 2 if isinstance(k, int) else [x // 2 for x in k]
    return p


# ---------------------------------------------------------------------------
# Pallas kernel: implicit-GEMM conv + BN shift (scale pre-folded) + SiLU.
# ---------------------------------------------------------------------------
def conv_bn_silu_kernel(x_ref, w_ref, shift_ref, o_ref, *,
                        k, s, d, tr, wo, cin, fuse_taps, approx_silu):
    # x_ref:     (1, Hq, Wq, s*s*Cin) halo-padded (space-to-depth for s>1) NHWC
    #            input, one batch element, VMEM-resident across the grid.
    # w_ref:     (k*k*Cin, tn) fused weights, or (k*k, Cin, tn) per-tap weights
    #            (BN scale folded in).  Resident across all row tiles.
    # shift_ref: (1, tn)            folded BN shift (f32).
    # o_ref:     (1, tr*Wo, tn)     output tile.
    r = pl.program_id(2)              # output-row tile index (innermost axis)
    row0 = r * tr                     # first output row of this tile
    if tr % 8 == 0:
        row0 = pl.multiple_of(row0, 8)

    def window(kh, kw):
        # Shifted input window for tap (kh, kw); unit-stride loads only
        # (stride handled by space-to-depth phases in the channel dim).
        qr, pr = divmod(kh * d, s)
        qc, pc = divmod(kw * d, s)
        rows = pl.ds(row0 + qr, tr)
        cols = pl.ds(qc, wo)
        if x_ref.shape[-1] == cin:                         # s == 1
            win = x_ref[0, rows, cols, :]
        else:                                              # phase channel slice
            win = x_ref[0, rows, cols, pl.ds((pr * s + pc) * cin, cin)]
        return win.reshape(tr * wo, cin)

    if fuse_taps:
        # Single MXU contraction with K = k*k*Cin: feeds the 128/256-deep MXU
        # and avoids k*k accumulator round-trips through VMEM.
        a = jnp.concatenate(
            [window(kh, kw) for kh in range(k) for kw in range(k)], axis=-1)
        acc = jnp.dot(a, w_ref[...], preferred_element_type=jnp.float32)
    else:
        tn = o_ref.shape[-1]
        acc = jnp.zeros((tr * wo, tn), jnp.float32)
        for kh in range(k):
            for kw in range(k):
                acc = acc + jnp.dot(window(kh, kw), w_ref[kh * k + kw],
                                    preferred_element_type=jnp.float32)

    y = acc + shift_ref[...]           # BN shift (scale folded into weights)
    if approx_silu:                    # bf16 path: EUP exp + approx reciprocal
        y = y * pl.reciprocal(1.0 + jnp.exp(-y), approx=True)
    else:                              # exact SiLU for the f32 checking path
        y = y * jax.nn.sigmoid(y)
    o_ref[0] = y.astype(o_ref.dtype)


def _pick_row_tile(ho, wo, max_pixels):
    """Largest tr dividing Ho with tr*Wo <= max_pixels and (tr*Wo) % 8 == 0."""
    for tr in range(ho, 0, -1):
        if ho % tr == 0 and tr * wo <= max_pixels and (tr * wo) % 8 == 0:
            return tr
    return ho   # full height: block equals the full output dim (always legal)


def _vmem_limit_bytes():
    """Generation-dependent scoped-VMEM limit."""
    try:
        cap = pltpu.get_tpu_info().vmem_capacity_bytes
        if cap >= 100 * 1024 * 1024:       # v5e / v6e: 128 MiB physical
            return 96 * 1024 * 1024
        return 48 * 1024 * 1024            # v7x: 64 MiB physical
    except Exception:
        return 64 * 1024 * 1024


def _default_cout_tile():
    """MXU-width-matched default Cout tile: 128 on v5e, 256 on v6e/v7x."""
    try:
        kind = jax.devices()[0].device_kind.lower()
        if "v5 lite" in kind or "v5e" in kind:
            return 128
    except Exception:
        pass
    return 256


def conv_module_forward(x_nchw, weight_oihw, gamma, beta, run_mean, run_var,
                        *, k=1, s=1, p=None, g=1, d=1, eps=1e-5,
                        compute_dtype=jnp.bfloat16,
                        block_rows=None, block_cout=None, fuse_taps=None):
    """Conv(c1, c2, k, s, p, g, d) forward: act(bn(conv(x))), SiLU, eval-mode BN."""
    if g != 1:
        raise NotImplementedError("grouped conv (g > 1) is not supported")
    assert isinstance(k, int)
    p = autopad(k, p, d)
    N, Cin, H, W = x_nchw.shape
    Cout = weight_oihw.shape[0]
    Ho = (H + 2 * p - d * (k - 1) - 1) // s + 1
    Wo = (W + 2 * p - d * (k - 1) - 1) // s + 1
    HW = Ho * Wo
    Hp, Wp = H + 2 * p, W + 2 * p
    out_dtype = x_nchw.dtype

    if fuse_taps is None:
        fuse_taps = Cin <= 64   # fuse k*k taps when per-tap K would underfeed MXU

    # NCHW -> NHWC + spatial halo pad (no im2col in HBM).  For s > 1, split
    # into s*s spatial phases (space-to-depth) so in-kernel loads are unit-stride.
    x_nhwc = jnp.transpose(x_nchw, (0, 2, 3, 1))
    x_pad = jnp.pad(x_nhwc, ((0, 0), (p, p), (p, p), (0, 0)))
    if s > 1:
        Hq, Wq = -(-Hp // s), -(-Wp // s)
        x_pad = jnp.pad(x_pad, ((0, 0), (0, Hq * s - Hp), (0, Wq * s - Wp), (0, 0)))
        x_pad = (x_pad.reshape(N, Hq, s, Wq, s, Cin)
                 .transpose(0, 1, 3, 2, 4, 5)
                 .reshape(N, Hq, Wq, s * s * Cin))
    else:
        Hq, Wq = Hp, Wp
    x_pad = x_pad.astype(compute_dtype)

    # Fold eval-mode BatchNorm into per-channel scale/shift; fold the scale
    # into the conv weights so the kernel epilogue is add + SiLU only.
    scale = gamma / jnp.sqrt(run_var + eps)                 # (Cout,)
    shift = beta - run_mean * scale                         # (Cout,)

    # Pad Cout to a lane multiple (128) only when the overhead is <= ~2x;
    # small Cout is stored at true width (masked stores beat 16x write blow-up).
    lane_tile = _default_cout_tile()
    if Cout >= 64:
        Cout_pad = ((Cout + 127) // 128) * 128
        tn_default = lane_tile if Cout_pad % lane_tile == 0 else 128
    else:
        Cout_pad = Cout
        tn_default = Cout

    # OIHW -> (k*k taps, Cin, Cout), BN-scale folded, Cout padded, cast.
    w_taps = jnp.transpose(weight_oihw, (2, 3, 1, 0)).reshape(k * k, Cin, Cout)
    w_taps = w_taps * scale[None, None, :]
    w_taps = jnp.pad(w_taps, ((0, 0), (0, 0), (0, Cout_pad - Cout)))
    w_taps = w_taps.astype(compute_dtype)
    shift_pad = jnp.pad(shift, (0, Cout_pad - Cout)).reshape(1, Cout_pad)
    shift_pad = shift_pad.astype(jnp.float32)

    tn = block_cout if block_cout is not None else tn_default
    max_pixels = 512 if fuse_taps else 256    # bound accumulator/window VMEM
    tr = block_rows if block_rows is not None else _pick_row_tile(Ho, Wo, max_pixels)
    assert Ho % tr == 0 and Cout_pad % tn == 0

    if fuse_taps:
        w_arg = w_taps.reshape(k * k * Cin, Cout_pad)
        w_spec = pl.BlockSpec((k * k * Cin, tn), lambda n, j, r: (0, j))
    else:
        w_arg = w_taps
        w_spec = pl.BlockSpec((k * k, Cin, tn), lambda n, j, r: (0, 0, j))

    # Grid = (batch, Cout tiles, row tiles): row tile innermost so the weight
    # slab (index depends only on j) stays VMEM-resident across all row tiles.
    grid = (N, Cout_pad // tn, Ho // tr)

    kernel = functools.partial(
        conv_bn_silu_kernel, k=k, s=s, d=d, tr=tr, wo=Wo, cin=Cin,
        fuse_taps=fuse_taps,
        approx_silu=(jnp.dtype(compute_dtype) != jnp.dtype(jnp.float32)))

    flops = 2 * N * HW * (k * k * Cin) * Cout_pad
    bytes_accessed = (x_pad.size * x_pad.dtype.itemsize
                      + w_arg.size * w_arg.dtype.itemsize
                      + shift_pad.size * 4
                      + N * HW * Cout_pad * jnp.dtype(out_dtype).itemsize)
    cost = pl.CostEstimate(flops=flops, transcendentals=N * HW * Cout_pad,
                           bytes_accessed=int(bytes_accessed))

    out = pl.pallas_call(
        kernel,
        out_shape=jax.ShapeDtypeStruct((N, HW, Cout_pad), out_dtype),
        grid_spec=pltpu.PrefetchScalarGridSpec(
            num_scalar_prefetch=0,
            grid=grid,
            in_specs=[
                # Halo-padded (space-to-depth) image for this batch element;
                # constant block index across (j, r) -> VMEM-resident.
                # TODO(synk): row-tile halo DMA / pl.Buffered(1) for v7x high-res.
                pl.BlockSpec((1, Hq, Wq, x_pad.shape[-1]),
                             lambda n, j, r: (n, 0, 0, 0)),
                w_spec,
                pl.BlockSpec((1, tn), lambda n, j, r: (0, j)),
            ],
            out_specs=pl.BlockSpec((1, tr * Wo, tn), lambda n, j, r: (n, r, j)),
        ),
        compiler_params=pltpu.CompilerParams(
            dimension_semantics=("parallel", "parallel", "parallel"),
            vmem_limit_bytes=_vmem_limit_bytes(),
        ),
        cost_estimate=cost,
    )(x_pad, w_arg, shift_pad)

    # (N, Ho*Wo, Cout_pad) -> drop channel padding -> NCHW
    out = out[:, :, :Cout].reshape(N, Ho, Wo, Cout)
    return jnp.transpose(out, (0, 3, 1, 2)).astype(out_dtype)


def _reference_forward(x_nchw, weight_oihw, gamma, beta, run_mean, run_var,
                       *, k=3, s=1, p=None, d=1, eps=1e-5):
    """Pure-JAX reference matching PyTorch Conv.forward (eval-mode BN, SiLU)."""
    p = autopad(k, p, d)
    y = lax.conv_general_dilated(
        x_nchw, weight_oihw,
        window_strides=(s, s),
        padding=((p, p), (p, p)),
        rhs_dilation=(d, d),
        dimension_numbers=("NCHW", "OIHW", "NCHW"),
    )
    sc = (gamma / jnp.sqrt(run_var + eps)).reshape(1, -1, 1, 1)
    sh = (beta - run_mean * gamma / jnp.sqrt(run_var + eps)).reshape(1, -1, 1, 1)
    y = y * sc + sh
    return y * jax.nn.sigmoid(y)


if __name__ == "__main__":
    key = jax.random.PRNGKey(0)
    kx, kw_, kg, kb, km, kv = jax.random.split(key, 6)

    c1, c2 = 4, 8
    N, H, W = 2, 16, 16
    x = jax.random.normal(kx, (N, c1, H, W), dtype=jnp.float32)               # NCHW input
    gamma = 1.0 + 0.1 * jax.random.normal(kg, (c2,), dtype=jnp.float32)       # BN weight
    beta = 0.1 * jax.random.normal(kb, (c2,), dtype=jnp.float32)              # BN bias
    run_mean = 0.05 * jax.random.normal(km, (c2,), dtype=jnp.float32)         # BN running_mean
    run_var = jnp.abs(1.0 + 0.1 * jax.random.normal(kv, (c2,), dtype=jnp.float32))  # BN running_var

    def check(k, s, d, *, compute_dtype, tol, **kw):
        w = jax.random.normal(kw_, (c2, c1, k, k), dtype=jnp.float32) * 0.1   # Conv2d weight, no bias
        ref = jax.block_until_ready(
            _reference_forward(x, w, gamma, beta, run_mean, run_var, k=k, s=s, d=d))
        out = jax.block_until_ready(
            conv_module_forward(x, w, gamma, beta, run_mean, run_var,
                                k=k, s=s, d=d, compute_dtype=compute_dtype, **kw))
        assert out.shape == ref.shape, (out.shape, ref.shape)
        np.testing.assert_allclose(np.asarray(out), np.asarray(ref), rtol=tol, atol=tol)

    # Conv(4, 8, k=3, s=1): f32 operands, fused-tap path (default for small Cin).
    # block_rows=8 forces two row tiles so multi-tile indexing is exercised.
    check(3, 1, 1, compute_dtype=jnp.float32, tol=2e-4, block_rows=8)
    # Same config, per-tap accumulate path (the one used for large Cin layers).
    check(3, 1, 1, compute_dtype=jnp.float32, tol=2e-4, block_rows=8, fuse_taps=False)
    # bf16 MXU operands (fast path on all generations), f32 accumulate/epilogue.
    check(3, 1, 1, compute_dtype=jnp.bfloat16, tol=5e-2, block_rows=8)
    # Stride-2 downsample: wrapper space-to-depth, unit-stride in-kernel loads.
    check(3, 2, 1, compute_dtype=jnp.float32, tol=2e-4, block_rows=4)
    # Dilation-2 conv.
    check(3, 1, 2, compute_dtype=jnp.float32, tol=2e-4, block_rows=8)
    # Pointwise Conv(4, 8, k=1) — the module's default kernel size.
    check(1, 1, 1, compute_dtype=jnp.float32, tol=2e-4, block_rows=8)

    print("KERNEL_OK")
</pallas_src>

<mosaic_0001>
module attributes {stable_mosaic.version = 11 : i64} {
  func.func @conv_bn_silu_kernel(%arg0: i32, %arg1: i32, %arg2: i32, %arg3: memref<1x18x18x4xf32, #tpu.memory_space<vmem>>, %arg4: memref<36x8xf32, #tpu.memory_space<vmem>>, %arg5: memref<1x8xf32, #tpu.memory_space<vmem>>, %arg6: memref<1x128x8xf32, #tpu.memory_space<vmem>>) attributes {dimension_semantics = [#tpu.dimension_semantics<parallel>, #tpu.dimension_semantics<parallel>, #tpu.dimension_semantics<parallel>], iteration_bounds = array<i64: 2, 1, 2>, scalar_prefetch = 0 : i64, scratch_operands = 0 : i64, tpu.core_type = #tpu.core_type<tc>, window_params = [{transform_indices = @transform_0, window_bounds = array<i64: 1, 18, 18, 4>}, {transform_indices = @transform_1, window_bounds = array<i64: 36, 8>}, {transform_indices = @transform_2, window_bounds = array<i64: 1, 8>}, {transform_indices = @transform_3, window_bounds = array<i64: 1, 128, 8>}]} {
    %c8_i32 = arith.constant 8 : i32
    %0 = arith.muli %arg2, %c8_i32 : i32
    %1 = tpu.assume_multiple %0, 8 : i32
    %c0_i32 = arith.constant 0 : i32
    %2 = arith.addi %1, %c0_i32 : i32
    %c0 = arith.constant 0 : index
    %3 = arith.index_cast %2 : i32 to index
    %c0_0 = arith.constant 0 : index
    %c0_1 = arith.constant 0 : index
    %4 = vector.load %arg3[%c0, %3, %c0_0, %c0_1] : memref<1x18x18x4xf32, #tpu.memory_space<vmem>>, vector<1x8x16x4xf32>
    %5 = vector.shape_cast %4 : vector<1x8x16x4xf32> to vector<8x16x4xf32>
    %6 = vector.shape_cast %5 : vector<8x16x4xf32> to vector<128x4xf32>
    %c0_i32_2 = arith.constant 0 : i32
    %7 = arith.addi %1, %c0_i32_2 : i32
    %c0_3 = arith.constant 0 : index
    %8 = arith.index_cast %7 : i32 to index
    %c1 = arith.constant 1 : index
    %c0_4 = arith.constant 0 : index
    %9 = vector.load %arg3[%c0_3, %8, %c1, %c0_4] : memref<1x18x18x4xf32, #tpu.memory_space<vmem>>, vector<1x8x16x4xf32>
    %10 = vector.shape_cast %9 : vector<1x8x16x4xf32> to vector<8x16x4xf32>
    %11 = vector.shape_cast %10 : vector<8x16x4xf32> to vector<128x4xf32>
    %c0_i32_5 = arith.constant 0 : i32
    %12 = arith.addi %1, %c0_i32_5 : i32
    %c0_6 = arith.constant 0 : index
    %13 = arith.index_cast %12 : i32 to index
    %c2 = arith.constant 2 : index
    %c0_7 = arith.constant 0 : index
    %14 = vector.load %arg3[%c0_6, %13, %c2, %c0_7] : memref<1x18x18x4xf32, #tpu.memory_space<vmem>>, vector<1x8x16x4xf32>
    %15 = vector.shape_cast %14 : vector<1x8x16x4xf32> to vector<8x16x4xf32>
    %16 = vector.shape_cast %15 : vector<8x16x4xf32> to vector<128x4xf32>
    %c1_i32 = arith.constant 1 : i32
    %17 = arith.addi %1, %c1_i32 : i32
    %c0_8 = arith.constant 0 : index
    %18 = arith.index_cast %17 : i32 to index
    %c0_9 = arith.constant 0 : index
    %c0_10 = arith.constant 0 : index
    %19 = vector.load %arg3[%c0_8, %18, %c0_9, %c0_10] : memref<1x18x18x4xf32, #tpu.memory_space<vmem>>, vector<1x8x16x4xf32>
    %20 = vector.shape_cast %19 : vector<1x8x16x4xf32> to vector<8x16x4xf32>
    %21 = vector.shape_cast %20 : vector<8x16x4xf32> to vector<128x4xf32>
    %c1_i32_11 = arith.constant 1 : i32
    %22 = arith.addi %1, %c1_i32_11 : i32
    %c0_12 = arith.constant 0 : index
    %23 = arith.index_cast %22 : i32 to index
    %c1_13 = arith.constant 1 : index
    %c0_14 = arith.constant 0 : index
    %24 = vector.load %arg3[%c0_12, %23, %c1_13, %c0_14] : memref<1x18x18x4xf32, #tpu.memory_space<vmem>>, vector<1x8x16x4xf32>
    %25 = vector.shape_cast %24 : vector<1x8x16x4xf32> to vector<8x16x4xf32>
    %26 = vector.shape_cast %25 : vector<8x16x4xf32> to vector<128x4xf32>
    %c1_i32_15 = arith.constant 1 : i32
    %27 = arith.addi %1, %c1_i32_15 : i32
    %c0_16 = arith.constant 0 : index
    %28 = arith.index_cast %27 : i32 to index
    %c2_17 = arith.constant 2 : index
    %c0_18 = arith.constant 0 : index
    %29 = vector.load %arg3[%c0_16, %28, %c2_17, %c0_18] : memref<1x18x18x4xf32, #tpu.memory_space<vmem>>, vector<1x8x16x4xf32>
    %30 = vector.shape_cast %29 : vector<1x8x16x4xf32> to vector<8x16x4xf32>
    %31 = vector.shape_cast %30 : vector<8x16x4xf32> to vector<128x4xf32>
    %c2_i32 = arith.constant 2 : i32
    %32 = arith.addi %1, %c2_i32 : i32
    %c0_19 = arith.constant 0 : index
    %33 = arith.index_cast %32 : i32 to index
    %c0_20 = arith.constant 0 : index
    %c0_21 = arith.constant 0 : index
    %34 = vector.load %arg3[%c0_19, %33, %c0_20, %c0_21] : memref<1x18x18x4xf32, #tpu.memory_space<vmem>>, vector<1x8x16x4xf32>
    %35 = vector.shape_cast %34 : vector<1x8x16x4xf32> to vector<8x16x4xf32>
    %36 = vector.shape_cast %35 : vector<8x16x4xf32> to vector<128x4xf32>
    %c2_i32_22 = arith.constant 2 : i32
    %37 = arith.addi %1, %c2_i32_22 : i32
    %c0_23 = arith.constant 0 : index
    %38 = arith.index_cast %37 : i32 to index
    %c1_24 = arith.constant 1 : index
    %c0_25 = arith.constant 0 : index
    %39 = vector.load %arg3[%c0_23, %38, %c1_24, %c0_25] : memref<1x18x18x4xf32, #tpu.memory_space<vmem>>, vector<1x8x16x4xf32>
    %40 = vector.shape_cast %39 : vector<1x8x16x4xf32> to vector<8x16x4xf32>
    %41 = vector.shape_cast %40 : vector<8x16x4xf32> to vector<128x4xf32>
    %c2_i32_26 = arith.constant 2 : i32
    %42 = arith.addi %1, %c2_i32_26 : i32
    %c0_27 = arith.constant 0 : index
    %43 = arith.index_cast %42 : i32 to index
    %c2_28 = arith.constant 2 : index
    %c0_29 = arith.constant 0 : index
    %44 = vector.load %arg3[%c0_27, %43, %c2_28, %c0_29] : memref<1x18x18x4xf32, #tpu.memory_space<vmem>>, vector<1x8x16x4xf32>
    %45 = vector.shape_cast %44 : vector<1x8x16x4xf32> to vector<8x16x4xf32>
    %46 = vector.shape_cast %45 : vector<8x16x4xf32> to vector<128x4xf32>
    %47 = tpu.concatenate %6, %11, %16, %21, %26, %31, %36, %41, %46 in 1 : vector<128x4xf32>, vector<128x4xf32>, vector<128x4xf32>, vector<128x4xf32>, vector<128x4xf32>, vector<128x4xf32>, vector<128x4xf32>, vector<128x4xf32>, vector<128x4xf32> -> vector<128x36xf32>
    %c0_30 = arith.constant 0 : index
    %c0_31 = arith.constant 0 : index
    %48 = vector.load %arg4[%c0_30, %c0_31] : memref<36x8xf32, #tpu.memory_space<vmem>>, vector<36x8xf32>
    %cst = arith.constant dense<0.000000e+00> : vector<128x8xf32>
    %49 = tpu.matmul %47, %48, %cst {dimension_numbers = #tpu.dot_dimension_numbers<[1], [0], [0], [1], [0, 0, 1, 1], [], []>} : vector<128x36xf32>, vector<36x8xf32>, vector<128x8xf32> -> vector<128x8xf32>
    %c0_32 = arith.constant 0 : index
    %c0_33 = arith.constant 0 : index
    %50 = vector.load %arg5[%c0_32, %c0_33] : memref<1x8xf32, #tpu.memory_space<vmem>>, vector<1x8xf32>
    %51 = vector.broadcast %50 : vector<1x8xf32> to vector<128x8xf32>
    %52 = arith.addf %49, %51 : vector<128x8xf32>
    %53 = arith.negf %52 : vector<128x8xf32>
    %54 = math.exp %53 : vector<128x8xf32>
    %cst_34 = arith.constant 1.000000e+00 : f32
    %55 = vector.broadcast %cst_34 : f32 to vector<128x8xf32>
    %56 = arith.addf %55, %54 : vector<128x8xf32>
    %57 = arith.divf %55, %56 : vector<128x8xf32>
    %58 = arith.mulf %52, %57 : vector<128x8xf32>
    %c0_35 = arith.constant 0 : index
    %c0_36 = arith.constant 0 : index
    %c0_37 = arith.constant 0 : index
    %59 = vector.load %arg6[%c0_35, %c0_36, %c0_37] : memref<1x128x8xf32, #tpu.memory_space<vmem>>, vector<1x128x8xf32>
    %60 = vector.shape_cast %59 : vector<1x128x8xf32> to vector<128x8xf32>
    %61 = vector.shape_cast %58 : vector<128x8xf32> to vector<1x128x8xf32>
    tpu.vector_store %arg6[%c0_35, %c0_36, %c0_37], %61 {strides = array<i32>} : memref<1x128x8xf32, #tpu.memory_space<vmem>>, vector<1x128x8xf32>,
    return
  }
  func.func @transform_0(%arg0: i32, %arg1: i32, %arg2: i32) -> (i32, i32, i32, i32) {
    %c0_i32 = arith.constant 0 : i32
    %c0_i32_0 = arith.constant 0 : i32
    %c0_i32_1 = arith.constant 0 : i32
    %c0_i32_2 = arith.constant 0 : i32
    return %arg0, %c0_i32, %c0_i32_0, %c0_i32_1 : i32, i32, i32, i32
  }
  func.func @transform_1(%arg0: i32, %arg1: i32, %arg2: i32) -> (i32, i32) {
    %c0_i32 = arith.constant 0 : i32
    %c0_i32_0 = arith.constant 0 : i32
    return %c0_i32, %arg1 : i32, i32
  }
  func.func @transform_2(%arg0: i32, %arg1: i32, %arg2: i32) -> (i32, i32) {
    %c0_i32 = arith.constant 0 : i32
    %c0_i32_0 = arith.constant 0 : i32
    return %c0_i32, %arg1 : i32, i32
  }
  func.func @transform_3(%arg0: i32, %arg1: i32, %arg2: i32) -> (i32, i32, i32) {
    %c0_i32 = arith.constant 0 : i32
    return %arg0, %arg2, %arg1 : i32, i32, i32
  }
}

</mosaic_0001>

<llo_original>
// kernel: tpu_custom_call.1
$region0: #{tpu_custom_call.1}
  #allocation0 [shape = 'u32[]', space=smem, size = 0x4, offset = 0x4, fixed_abs, tag = 'smem constant byte address 0x4 - core index']
  #allocation1 [shape = 'u32[144,128]{1,0:T(1,128)}', space=vmem, size = 0x12000, scoped, tag = 'internal scratch']
  %s0 = inlined_call_operand.hbm [shape: f32[2,18,18,4], index: 0, kind: input, shape index: {}]
  %s1 = inlined_call_operand.hbm [shape: f32[36,8], index: 1, kind: input, shape index: {}]
  %s2 = inlined_call_operand.hbm [shape: f32[1,8], index: 2, kind: input, shape index: {}]
  %s3 = inlined_call_operand.hbm [shape: f32[2,256,8], index: 3, kind: output, shape index: {}]
  %s4 = sld [smem:[#allocation0]]
  $region57: #{tpu_custom_call.1} parent=0
    _
  %s6 = ssub.s32 1, %s4
  %s7 = scalar_select 0, %s6, %s4
  $region1: #{tpu_custom_call.1} parent=0
    #allocation2 [shape = 'u8[442368]{0}', space=vmem, size = 0x6c000, scoped, tag = 'input window, operand 0']
    #allocation3 [shape = 's32[2]{0}', space=sflag, size = 0x8, scoped, tag = 'scoped memory for tpu_custom_call.1']
    #allocation4 [shape = 's32[2]{0}', space=sflag, size = 0x8, scoped, tag = 'scoped memory for tpu_custom_call.1']
    #allocation5 [shape = 'u8[20480]{0}', space=vmem, size = 0x5000, scoped, tag = 'input window, operand 1, single buffered']
    #allocation6 [shape = 's32[1]{0}', space=sflag, size = 0x4, scoped, tag = 'scoped memory for tpu_custom_call.1']
    #allocation7 [shape = 'u8[512]{0}', space=vmem, size = 0x400, scoped, tag = 'input window, operand 2, single buffered']
    #allocation8 [shape = 'u8[131072]{0}', space=vmem, size = 0x20000, scoped, tag = 'output window, operand 0']
    %8 = vsyncpa [#allocation3], 0
    %s9 = scalar_lea.sflag [#allocation3], 1
    %10 = vsyncpa %s9, 0
    %11 = vsyncpa [#allocation6], 0
    %12 = vsyncpa [#allocation4], 0
    %s13 = scalar_lea.sflag [#allocation4], 1
    %14 = vsyncpa %s13, 0
    loop: start=0, step=1, limit=6
    $region2: #{tpu_custom_call.1} parent=1 // loop_pre_header
      _
    $region3: #{tpu_custom_call.1} parent=1 // loop_header
      %s16 = sphi 0, %s20
      %p17 = scmp.ge.s32.totalorder %s16, 6
      %s23 = sphi 0, %s42
      %s24 = sphi 0, %s38
      %s25 = sphi 0, %s34
      %s26 = sphi 0, %s23
      %s27 = sphi 0, %s24
      %s28 = sphi 0, %s25
      %s29 = sphi 0, %s26
      %s30 = sphi 0, %s27
      %s31 = sphi 0, %s28
      %s45 = sphi 0, %s47
      %s48 = sphi 0, %s45
      %s49 = sphi 0, %s48
      %s65 = sphi 0, %s49
      %s71 = sphi 0, %s73
      %s74 = sphi 0, %s71
      %s75 = sphi 0, %s74
      %s91 = sphi 0, %s75
      %s97 = sphi 0, %s99
      %s100 = sphi 0, %s97
      %s101 = sphi 0, %s100
      %s117 = sphi 0, %s101
      %s127 = sphi 0, %s129
      %s130 = sphi 0, %s127
      %s131 = sphi 0, %s130
      %s147 = sphi 0, %s131
    $region4: #{tpu_custom_call.1} parent=1 // loop_header_branch
      %19 = sbr.rel (%p17) target = $region8
    $region5: #{tpu_custom_call.1} parent=1 // loop_body
      %s21 = ssub.s32 %s16, 1
      %s22 = ssub.s32 %s16, 2
      %s32 = sadd.s32 1, %s25
      %p33 = scmp.ge.s32.totalorder %s32, 2
      %s34 = scalar_select %p33, 0, %s32
      %s35 = sadd.s32 1, %s24
      %s36 = scalar_select %p33, %s35, %s24
      %p37 = scmp.ge.s32.totalorder %s36, 1
      %s38 = scalar_select %p37, 0, %s36
      %s39 = sadd.s32 1, %s23
      %s40 = scalar_select %p37, %s39, %s23
      %p41 = scmp.ge.s32.totalorder %s40, 2
      %s42 = scalar_select %p41, 0, %s40
      %s43 = ssub.s32 %s23, %s42
      %p44 = scmp.eq.s32.totalorder %s43, 0
      %s46 = sadd.s32 %s45, 1
      %s47 = scalar_select %p44, %s45, %s46
      %p50 = pneg %p44
      %p51 = scmp.eq.s32.totalorder %s16, 3
      %p52 = por %p50, %p51
      %p53 = scmp.ne.s32.totalorder %s45, %s48
      %p54 = scmp.eq.s32.totalorder %s16, 0
      %p55 = por %p53, %p54
      %p56 = scmp.ne.s32.totalorder %s45, %s48
      %p57 = scmp.eq.s32.totalorder %s21, 3
      %p58 = por %p56, %p57
      %p59 = scmp.ne.s32.totalorder %s48, %s49
      %p60 = scmp.eq.s32.totalorder %s21, 0
      %p61 = por %p59, %p60
      %p62 = scmp.ne.s32.totalorder %s48, %s49
      %p63 = scmp.eq.s32.totalorder %s22, 3
      %p64 = por %p62, %p63
      %p66 = scmp.ne.s32.totalorder %s49, %s65
      %p67 = scmp.eq.s32.totalorder %s22, 0
      %p68 = por %p66, %p67
      %s69 = ssub.s32 %s24, %s38
      %p70 = scmp.eq.s32.totalorder %s69, 0
      %s72 = sadd.s32 %s71, 1
      %s73 = scalar_select %p70, %s71, %s72
      %p76 = pneg %p70
      %p77 = scmp.eq.s32.totalorder %s16, 3
      %p78 = por %p76, %p77
      %p79 = scmp.ne.s32.totalorder %s71, %s74
      %p80 = scmp.eq.s32.totalorder %s16, 0
      %p81 = por %p79, %p80
      %p82 = scmp.ne.s32.totalorder %s71, %s74
      %p83 = scmp.eq.s32.totalorder %s21, 3
      %p84 = por %p82, %p83
      %p85 = scmp.ne.s32.totalorder %s74, %s75
      %p86 = scmp.eq.s32.totalorder %s21, 0
      %p87 = por %p85, %p86
      %p88 = scmp.ne.s32.totalorder %s74, %s75
      %p89 = scmp.eq.s32.totalorder %s22, 3
      %p90 = por %p88, %p89
      %p92 = scmp.ne.s32.totalorder %s75, %s91
      %p93 = scmp.eq.s32.totalorder %s22, 0
      %p94 = por %p92, %p93
      %s95 = ssub.s32 %s24, %s38
      %p96 = scmp.eq.s32.totalorder %s95, 0
      %s98 = sadd.s32 %s97, 1
      %s99 = scalar_select %p96, %s97, %s98
      %p102 = pneg %p96
      %p103 = scmp.eq.s32.totalorder %s16, 3
      %p104 = por %p102, %p103
      %p105 = scmp.ne.s32.totalorder %s97, %s100
      %p106 = scmp.eq.s32.totalorder %s16, 0
      %p107 = por %p105, %p106
      %p108 = scmp.ne.s32.totalorder %s97, %s100
      %p109 = scmp.eq.s32.totalorder %s21, 3
      %p110 = por %p108, %p109
      %p111 = scmp.ne.s32.totalorder %s100, %s101
      %p112 = scmp.eq.s32.totalorder %s21, 0
      %p113 = por %p111, %p112
      %p114 = scmp.ne.s32.totalorder %s100, %s101
      %p115 = scmp.eq.s32.totalorder %s22, 3
      %p116 = por %p114, %p115
      %p118 = scmp.ne.s32.totalorder %s101, %s117
      %p119 = scmp.eq.s32.totalorder %s22, 0
      %p120 = por %p118, %p119
      %s121 = ssub.s32 %s23, %s42
      %s122 = ssub.s32 %s25, %s34
      %s123 = sor.u32 %s121, %s122
      %s124 = ssub.s32 %s24, %s38
      %s125 = sor.u32 %s123, %s124
      %p126 = scmp.eq.s32.totalorder %s125, 0
      %s128 = sadd.s32 %s127, 1
      %s129 = scalar_select %p126, %s127, %s128
      %p132 = pneg %p126
      %p133 = scmp.eq.s32.totalorder %s16, 3
      %p134 = por %p132, %p133
      %p135 = scmp.ne.s32.totalorder %s127, %s130
      %p136 = scmp.eq.s32.totalorder %s16, 0
      %p137 = por %p135, %p136
      %p138 = scmp.ne.s32.totalorder %s127, %s130
      %p139 = scmp.eq.s32.totalorder %s21, 3
      %p140 = por %p138, %p139
      %p141 = scmp.ne.s32.totalorder %s130, %s131
      %p142 = scmp.eq.s32.totalorder %s21, 0
      %p143 = por %p141, %p142
      %p144 = scmp.ne.s32.totalorder %s130, %s131
      %p145 = scmp.eq.s32.totalorder %s22, 3
      %p146 = por %p144, %p145
      %p148 = scmp.ne.s32.totalorder %s131, %s147
      %p149 = scmp.eq.s32.totalorder %s22, 0
      %p150 = por %p148, %p149
      %p151 = scmp.le.s32.totalorder 1, %s16
      %p152 = scmp.lt.s32.totalorder %s16, 5
      %p153 = pnand %p151, %p152
      %p154 = pneg %p153
      // Predicated region
      $region9: #{tpu_custom_call.1} parent=5 // pred_check
        _
      $region10: #{tpu_custom_call.1} parent=5 // pred_check_branch
        %156 = sbr.rel (%p153) target = $region12
      $region11: #{tpu_custom_call.1} parent=5 // pred_region
        %s157 = ssub.s32 %s16, 1
        // Predicated region
        $region13: #{tpu_custom_call.1} parent=11 // pred_check
          %p158 = pneg %p87
        $region14: #{tpu_custom_call.1} parent=11 // pred_check_branch
          %160 = sbr.rel (%p158) target = $region16
        $region15: #{tpu_custom_call.1} parent=11 // pred_region
          %s162 = ssub.s32 640, 640
          %163 = vsyncadd [#allocation6], %s162
          %s164 = smul.addr %s27, 128
          %s165 = scalar_lea.hbm %s1, %s164
          %s166 = sshll.u32 [#allocation5], 4
          %s167 = int_to_ptr.vmem [resolvable:$true] %s166
          %172 = dma.hbm_to_vmem [thread:$0]  %s165, 640, %s167, [#allocation6], 128, 128, 8
        $region16: #{tpu_custom_call.1} parent=11 // pred_fallthru
          _
        // Predicated region
        $region17: #{tpu_custom_call.1} parent=11 // pred_check
          %p173 = pneg %p113
        $region18: #{tpu_custom_call.1} parent=11 // pred_check_branch
          %175 = sbr.rel (%p173) target = $region20
        $region19: #{tpu_custom_call.1} parent=11 // pred_region
          %s177 = ssub.s32 16, 16
          %178 = vsyncadd [#allocation6], %s177
          %s179 = smul.addr %s27, 16
          %s180 = scalar_lea.hbm %s2, %s179
          %s182 = sshll.u32 [#allocation7], 4
          %s183 = int_to_ptr.vmem [resolvable:$true] %s182
          %185 = dma.hbm_to_vmem [thread:$0]  %s180, 16, %s183, [#allocation6]
        $region20: #{tpu_custom_call.1} parent=11 // pred_fallthru
          _
      $region12: #{tpu_custom_call.1} parent=5 // pred_fallthru
        _
      %p186 = scmp.lt.s32.totalorder %s16, 4
      // Predicated region
      $region21: #{tpu_custom_call.1} parent=5 // pred_check
        %p187 = pneg %p186
      $region22: #{tpu_custom_call.1} parent=5 // pred_check_branch
        %189 = sbr.rel (%p187) target = $region24
      $region23: #{tpu_custom_call.1} parent=5 // pred_region
        // Predicated region
        $region25: #{tpu_custom_call.1} parent=23 // pred_check
          %p190 = pneg %p55
        $region26: #{tpu_custom_call.1} parent=23 // pred_check_branch
          %192 = sbr.rel (%p190) target = $region28
        $region27: #{tpu_custom_call.1} parent=23 // pred_region
          %s193 = sand.u32 %s45, 1
          %s194 = scalar_lea.sflag [#allocation3], %s193
          %s195 = sand.u32 %s45, 1
          %s196 = smul.addr %s195, 432
          %s197 = scalar_lea.vmem [#allocation2], %s196
          %s199 = ssub.s32 6912, 6912
          %200 = vsyncadd %s194, %s199
          %s201 = smul.addr %s23, 54
          %s202 = smul.addr %s201, 128
          %s203 = scalar_lea.hbm %s0, %s202
          %s204 = sshll.u32 %s197, 4
          %s205 = int_to_ptr.vmem [resolvable:$true] %s204
          %210 = dma.hbm_to_vmem [thread:$0]  %s203, 6912, %s205, %s194, 128, 128, 8
        $region28: #{tpu_custom_call.1} parent=23 // pred_fallthru
          _
      $region24: #{tpu_custom_call.1} parent=5 // pred_fallthru
        _
      %p211 = scmp.le.s32.totalorder 1, %s16
      %p212 = scmp.lt.s32.totalorder %s16, 5
      %p213 = pnand %p211, %p212
      %p214 = pneg %p213
      // Predicated region
      $region29: #{tpu_custom_call.1} parent=5 // pred_check
        _
      $region30: #{tpu_custom_call.1} parent=5 // pred_check_branch
        %216 = sbr.rel (%p213) target = $region32
      $region31: #{tpu_custom_call.1} parent=5 // pred_region
        %s217 = ssub.s32 %s16, 1
        %s218 = sand.u32 %s48, 1
        %s219 = scalar_lea.sflag [#allocation3], %s218
        %s220 = sand.u32 %s48, 1
        %s221 = smul.addr %s220, 432
        %s222 = scalar_lea.vmem [#allocation2], %s221
        // Predicated region
        $region33: #{tpu_custom_call.1} parent=31 // pred_check
          %p223 = pneg %p61
        $region34: #{tpu_custom_call.1} parent=31 // pred_check_branch
          %225 = sbr.rel (%p223) target = $region36
        $region35: #{tpu_custom_call.1} parent=31 // pred_region
          %226 = dma.done %s219, 6912
        $region36: #{tpu_custom_call.1} parent=31 // pred_fallthru
          _
        // Predicated region
        $region37: #{tpu_custom_call.1} parent=31 // pred_check
          %p227 = pneg %p87
        $region38: #{tpu_custom_call.1} parent=31 // pred_check_branch
          %229 = sbr.rel (%p227) target = $region40
        $region39: #{tpu_custom_call.1} parent=31 // pred_region
          %230 = dma.done [#allocation6], 640
        $region40: #{tpu_custom_call.1} parent=31 // pred_fallthru
          _
        // Predicated region
        $region41: #{tpu_custom_call.1} parent=31 // pred_check
          %p231 = pneg %p113
        $region42: #{tpu_custom_call.1} parent=31 // pred_check_branch
          %233 = sbr.rel (%p231) target = $region44
        $region43: #{tpu_custom_call.1} parent=31 // pred_region
          %234 = dma.done [#allocation6], 16
        $region44: #{tpu_custom_call.1} parent=31 // pred_fallthru
          _
        %s235 = sand.u32 %s48, 1
        %s236 = scalar_lea.sflag [#allocation3], %s235
        %s237 = sand.u32 %s48, 1
        %s238 = smul.addr %s237, 432
        %s239 = scalar_lea.vmem [#allocation2], %s238
        %p240 = pneg %p61
        %p241 = pneg %p58
        %p242 = pneg %p87
        %p243 = pneg %p84
        %p244 = pneg %p113
        %p245 = pneg %p110
        %p246 = pneg %p143
        %p247 = pneg %p140
        %s248 = sand.u32 %s130, 1
        %s249 = scalar_lea.sflag [#allocation4], %s248
        %s250 = sand.u32 %s130, 1
        %s251 = smul.addr %s250, 128
        %s252 = scalar_lea.vmem [#allocation8], %s251
        %s253 = smul.u32 16, %s28
        %s254 = smul.u32 %s28, 8
        %s255 = smul.u32 %s254, 24
        %s256 = scalar_lea.vmem %s222, %s255 [#allocation2]
        %v257 = vld [vmem:[%s256] sm:$0xff]
        %v258 = vld [vmem:[%s256 + $0x8] sm:$0xff]
        %v259 = vld [vmem:[%s256 + $0x18] sm:$0xff]
        %v260 = vld [vmem:[%s256 + $0x20] sm:$0xff]
        %v261 = vld [vmem:[%s256 + $0x30] sm:$0xff]
        %v262 = vld [vmem:[%s256 + $0x38] sm:$0xff]
        %v263 = vld [vmem:[%s256 + $0x48] sm:$0xff]
        %v264 = vld [vmem:[%s256 + $0x50] sm:$0xff]
        %v265 = vld [vmem:[%s256 + $0x60] sm:$0xff]
        %v266 = vld [vmem:[%s256 + $0x68] sm:$0xff]
        %v267 = vld [vmem:[%s256 + $0x78] sm:$0xff]
        %v268 = vld [vmem:[%s256 + $0x80] sm:$0xff]
        %v269 = vld [vmem:[%s256 + $0x90] sm:$0xff]
        %v270 = vld [vmem:[%s256 + $0x98] sm:$0xff]
        %v271 = vld [vmem:[%s256 + $0xa8] sm:$0xff]
        %v272 = vld [vmem:[%s256 + $0xb0] sm:$0xff]
        %v273 = vld [vmem:[%s256 + $0x1] sm:$0xff]
        %v274 = vld [vmem:[%s256 + $0x9] sm:$0xff]
        %v275 = vld [vmem:[%s256 + $0x19] sm:$0xff]
        %v276 = vld [vmem:[%s256 + $0x21] sm:$0xff]
        %v277 = vld [vmem:[%s256 + $0x31] sm:$0xff]
        %v278 = vld [vmem:[%s256 + $0x39] sm:$0xff]
        %v279 = vld [vmem:[%s256 + $0x49] sm:$0xff]
        %v280 = vld [vmem:[%s256 + $0x51] sm:$0xff]
        %v281 = vld [vmem:[%s256 + $0x61] sm:$0xff]
        %v282 = vld [vmem:[%s256 + $0x69] sm:$0xff]
        %v283 = vld [vmem:[%s256 + $0x79] sm:$0xff]
        %v284 = vld [vmem:[%s256 + $0x81] sm:$0xff]
        %v285 = vld [vmem:[%s256 + $0x91] sm:$0xff]
        %v286 = vld [vmem:[%s256 + $0x99] sm:$0xff]
        %v287 = vld [vmem:[%s256 + $0xa9] sm:$0xff]
        %v288 = vld [vmem:[%s256 + $0xb1] sm:$0xff]
        %v289 = vld [vmem:[%s256 + $0x2] sm:$0xff]
        %v290 = vld [vmem:[%s256 + $0xa] sm:$0xff]
        %v291 = vld [vmem:[%s256 + $0x1a] sm:$0xff]
        %v292 = vld [vmem:[%s256 + $0x22] sm:$0xff]
        %v293 = vld [vmem:[%s256 + $0x32] sm:$0xff]
        %v294 = vld [vmem:[%s256 + $0x3a] sm:$0xff]
        %v295 = vld [vmem:[%s256 + $0x4a] sm:$0xff]
        %v296 = vld [vmem:[%s256 + $0x52] sm:$0xff]
        %v297 = vld [vmem:[%s256 + $0x62] sm:$0xff]
        %v298 = vld [vmem:[%s256 + $0x6a] sm:$0xff]
        %v299 = vld [vmem:[%s256 + $0x7a] sm:$0xff]
        %v300 = vld [vmem:[%s256 + $0x82] sm:$0xff]
        %v301 = vld [vmem:[%s256 + $0x92] sm:$0xff]
        %v302 = vld [vmem:[%s256 + $0x9a] sm:$0xff]
        %v303 = vld [vmem:[%s256 + $0xaa] sm:$0xff]
        %v304 = vld [vmem:[%s256 + $0xb2] sm:$0xff]
        %s305 = sadd.s32 %s254, 1
        %s306 = smul.u32 %s305, 24
        %s307 = scalar_lea.vmem %s222, %s306 [#allocation2]
        %v308 = vld [vmem:[%s307] sm:$0xff]
        %v309 = vld [vmem:[%s307 + $0x8] sm:$0xff]
        %v310 = vld [vmem:[%s307 + $0x18] sm:$0xff]
        %v311 = vld [vmem:[%s307 + $0x20] sm:$0xff]
        %v312 = vld [vmem:[%s307 + $0x30] sm:$0xff]
        %v313 = vld [vmem:[%s307 + $0x38] sm:$0xff]
        %v314 = vld [vmem:[%s307 + $0x48] sm:$0xff]
        %v315 = vld [vmem:[%s307 + $0x50] sm:$0xff]
        %v316 = vld [vmem:[%s307 + $0x60] sm:$0xff]
        %v317 = vld [vmem:[%s307 + $0x68] sm:$0xff]
        %v318 = vld [vmem:[%s307 + $0x78] sm:$0xff]
        %v319 = vld [vmem:[%s307 + $0x80] sm:$0xff]
        %v320 = vld [vmem:[%s307 + $0x90] sm:$0xff]
        %v321 = vld [vmem:[%s307 + $0x98] sm:$0xff]
        %v322 = vld [vmem:[%s307 + $0xa8] sm:$0xff]
        %v323 = vld [vmem:[%s307 + $0xb0] sm:$0xff]
        %v324 = vld [vmem:[%s307 + $0x1] sm:$0xff]
        %v325 = vld [vmem:[%s307 + $0x9] sm:$0xff]
        %v326 = vld [vmem:[%s307 + $0x19] sm:$0xff]
        %v327 = vld [vmem:[%s307 + $0x21] sm:$0xff]
        %v328 = vld [vmem:[%s307 + $0x31] sm:$0xff]
        %v329 = vld [vmem:[%s307 + $0x39] sm:$0xff]
        %v330 = vld [vmem:[%s307 + $0x49] sm:$0xff]
        %v331 = vld [vmem:[%s307 + $0x51] sm:$0xff]
        %v332 = vld [vmem:[%s307 + $0x61] sm:$0xff]
        %v333 = vld [vmem:[%s307 + $0x69] sm:$0xff]
        %v334 = vld [vmem:[%s307 + $0x79] sm:$0xff]
        %v335 = vld [vmem:[%s307 + $0x81] sm:$0xff]
        %v336 = vld [vmem:[%s307 + $0x91] sm:$0xff]
        %v337 = vld [vmem:[%s307 + $0x99] sm:$0xff]
        %v338 = vld [vmem:[%s307 + $0xa9] sm:$0xff]
        %v339 = vld [vmem:[%s307 + $0xb1] sm:$0xff]
        %v340 = vld [vmem:[%s307 + $0x2] sm:$0xff]
        %v341 = vld [vmem:[%s307 + $0xa] sm:$0xff]
        %v342 = vld [vmem:[%s307 + $0x1a] sm:$0xff]
        %v343 = vld [vmem:[%s307 + $0x22] sm:$0xff]
        %v344 = vld [vmem:[%s307 + $0x32] sm:$0xff]
        %v345 = vld [vmem:[%s307 + $0x3a] sm:$0xff]
        %v346 = vld [vmem:[%s307 + $0x4a] sm:$0xff]
        %v347 = vld [vmem:[%s307 + $0x52] sm:$0xff]
        %v348 = vld [vmem:[%s307 + $0x62] sm:$0xff]
        %v349 = vld [vmem:[%s307 + $0x6a] sm:$0xff]
        %v350 = vld [vmem:[%s307 + $0x7a] sm:$0xff]
        %v351 = vld [vmem:[%s307 + $0x82] sm:$0xff]
        %v352 = vld [vmem:[%s307 + $0x92] sm:$0xff]
        %v353 = vld [vmem:[%s307 + $0x9a] sm:$0xff]
        %v354 = vld [vmem:[%s307 + $0xaa] sm:$0xff]
        %v355 = vld [vmem:[%s307 + $0xb2] sm:$0xff]
        %s356 = sadd.s32 %s254, 2
        %s357 = smul.u32 %s356, 24
        %s358 = scalar_lea.vmem %s222, %s357 [#allocation2]
        %v359 = vld [vmem:[%s358] sm:$0xff]
        %v360 = vld [vmem:[%s358 + $0x8] sm:$0xff]
        %v361 = vld [vmem:[%s358 + $0x18] sm:$0xff]
        %v362 = vld [vmem:[%s358 + $0x20] sm:$0xff]
        %v363 = vld [vmem:[%s358 + $0x30] sm:$0xff]
        %v364 = vld [vmem:[%s358 + $0x38] sm:$0xff]
        %v365 = vld [vmem:[%s358 + $0x48] sm:$0xff]
        %v366 = vld [vmem:[%s358 + $0x50] sm:$0xff]
        %v367 = vld [vmem:[%s358 + $0x60] sm:$0xff]
        %v368 = vld [vmem:[%s358 + $0x68] sm:$0xff]
        %v369 = vld [vmem:[%s358 + $0x78] sm:$0xff]
        %v370 = vld [vmem:[%s358 + $0x80] sm:$0xff]
        %v371 = vld [vmem:[%s358 + $0x90] sm:$0xff]
        %v372 = vld [vmem:[%s358 + $0x98] sm:$0xff]
        %v373 = vld [vmem:[%s358 + $0xa8] sm:$0xff]
        %v374 = vld [vmem:[%s358 + $0xb0] sm:$0xff]
        %v375 = vld [vmem:[%s358 + $0x1] sm:$0xff]
        %v376 = vld [vmem:[%s358 + $0x9] sm:$0xff]
        %v377 = vld [vmem:[%s358 + $0x19] sm:$0xff]
        %v378 = vld [vmem:[%s358 + $0x21] sm:$0xff]
        %v379 = vld [vmem:[%s358 + $0x31] sm:$0xff]
        %v380 = vld [vmem:[%s358 + $0x39] sm:$0xff]
        %v381 = vld [vmem:[%s358 + $0x49] sm:$0xff]
        %v382 = vld [vmem:[%s358 + $0x51] sm:$0xff]
        %v383 = vld [vmem:[%s358 + $0x61] sm:$0xff]
        %v384 = vld [vmem:[%s358 + $0x69] sm:$0xff]
        %v385 = vld [vmem:[%s358 + $0x79] sm:$0xff]
        %v386 = vld [vmem:[%s358 + $0x81] sm:$0xff]
        %v387 = vld [vmem:[%s358 + $0x91] sm:$0xff]
        %v388 = vld [vmem:[%s358 + $0x99] sm:$0xff]
        %v389 = vld [vmem:[%s358 + $0xa9] sm:$0xff]
        %v390 = vld [vmem:[%s358 + $0xb1] sm:$0xff]
        %v391 = vld [vmem:[%s358 + $0x2] sm:$0xff]
        %v392 = vld [vmem:[%s358 + $0xa] sm:$0xff]
        %v393 = vld [vmem:[%s358 + $0x1a] sm:$0xff]
        %v394 = vld [vmem:[%s358 + $0x22] sm:$0xff]
        %v395 = vld [vmem:[%s358 + $0x32] sm:$0xff]
        %v396 = vld [vmem:[%s358 + $0x3a] sm:$0xff]
        %v397 = vld [vmem:[%s358 + $0x4a] sm:$0xff]
        %v398 = vld [vmem:[%s358 + $0x52] sm:$0xff]
        %v399 = vld [vmem:[%s358 + $0x62] sm:$0xff]
        %v400 = vld [vmem:[%s358 + $0x6a] sm:$0xff]
        %v401 = vld [vmem:[%s358 + $0x7a] sm:$0xff]
        %v402 = vld [vmem:[%s358 + $0x82] sm:$0xff]
        %v403 = vld [vmem:[%s358 + $0x92] sm:$0xff]
        %v404 = vld [vmem:[%s358 + $0x9a] sm:$0xff]
        %v405 = vld [vmem:[%s358 + $0xaa] sm:$0xff]
        %v406 = vld [vmem:[%s358 + $0xb2] sm:$0xff]
        %423 = vrot.lane.b32.xlu0 %v273, 4
        %v424 = vpop.permute.xlu0 %423
        %425 = vrot.lane.b32.xlu0 %v274, 4
        %v426 = vpop.permute.xlu0 %425
        %427 = vrot.lane.b32.xlu0 %v275, 4
        %v428 = vpop.permute.xlu0 %427
        %429 = vrot.lane.b32.xlu0 %v276, 4
        %v430 = vpop.permute.xlu0 %429
        %431 = vrot.lane.b32.xlu0 %v277, 4
        %v432 = vpop.permute.xlu0 %431
        %433 = vrot.lane.b32.xlu0 %v278, 4
        %v434 = vpop.permute.xlu0 %433
        %435 = vrot.lane.b32.xlu0 %v279, 4
        %v436 = vpop.permute.xlu0 %435
        %437 = vrot.lane.b32.xlu0 %v280, 4
        %v438 = vpop.permute.xlu0 %437
        %439 = vrot.lane.b32.xlu0 %v281, 4
        %v440 = vpop.permute.xlu0 %439
        %441 = vrot.lane.b32.xlu0 %v282, 4
        %v442 = vpop.permute.xlu0 %441
        %443 = vrot.lane.b32.xlu0 %v283, 4
        %v444 = vpop.permute.xlu0 %443
        %445 = vrot.lane.b32.xlu0 %v284, 4
        %v446 = vpop.permute.xlu0 %445
        %447 = vrot.lane.b32.xlu0 %v285, 4
        %v448 = vpop.permute.xlu0 %447
        %449 = vrot.lane.b32.xlu0 %v286, 4
        %v450 = vpop.permute.xlu0 %449
        %451 = vrot.lane.b32.xlu0 %v287, 4
        %v452 = vpop.permute.xlu0 %451
        %453 = vrot.lane.b32.xlu0 %v288, 4
        %v454 = vpop.permute.xlu0 %453
        %487 = vrot.lane.b32.xlu0 %v289, 8
        %v488 = vpop.permute.xlu0 %487
        %489 = vrot.lane.b32.xlu0 %v290, 8
        %v490 = vpop.permute.xlu0 %489
        %491 = vrot.lane.b32.xlu0 %v291, 8
        %v492 = vpop.permute.xlu0 %491
        %493 = vrot.lane.b32.xlu0 %v292, 8
        %v494 = vpop.permute.xlu0 %493
        %495 = vrot.lane.b32.xlu0 %v293, 8
        %v496 = vpop.permute.xlu0 %495
        %497 = vrot.lane.b32.xlu0 %v294, 8
        %v498 = vpop.permute.xlu0 %497
        %499 = vrot.lane.b32.xlu0 %v295, 8
        %v500 = vpop.permute.xlu0 %499
        %501 = vrot.lane.b32.xlu0 %v296, 8
        %v502 = vpop.permute.xlu0 %501
        %503 = vrot.lane.b32.xlu0 %v297, 8
        %v504 = vpop.permute.xlu0 %503
        %505 = vrot.lane.b32.xlu0 %v298, 8
        %v506 = vpop.permute.xlu0 %505
        %507 = vrot.lane.b32.xlu0 %v299, 8
        %v508 = vpop.permute.xlu0 %507
        %509 = vrot.lane.b32.xlu0 %v300, 8
        %v510 = vpop.permute.xlu0 %509
        %511 = vrot.lane.b32.xlu0 %v301, 8
        %v512 = vpop.permute.xlu0 %511
        %513 = vrot.lane.b32.xlu0 %v302, 8
        %v514 = vpop.permute.xlu0 %513
        %515 = vrot.lane.b32.xlu0 %v303, 8
        %v516 = vpop.permute.xlu0 %515
        %517 = vrot.lane.b32.xlu0 %v304, 8
        %v518 = vpop.permute.xlu0 %517
        %551 = vrot.lane.b32.xlu0 %v308, 12
        %v552 = vpop.permute.xlu0 %551
        %553 = vrot.lane.b32.xlu0 %v309, 12
        %v554 = vpop.permute.xlu0 %553
        %555 = vrot.lane.b32.xlu0 %v310, 12
        %v556 = vpop.permute.xlu0 %555
        %557 = vrot.lane.b32.xlu0 %v311, 12
        %v558 = vpop.permute.xlu0 %557
        %559 = vrot.lane.b32.xlu0 %v312, 12
        %v560 = vpop.permute.xlu0 %559
        %561 = vrot.lane.b32.xlu0 %v313, 12
        %v562 = vpop.permute.xlu0 %561
        %563 = vrot.lane.b32.xlu0 %v314, 12
        %v564 = vpop.permute.xlu0 %563
        %565 = vrot.lane.b32.xlu0 %v315, 12
        %v566 = vpop.permute.xlu0 %565
        %567 = vrot.lane.b32.xlu0 %v316, 12
        %v568 = vpop.permute.xlu0 %567
        %569 = vrot.lane.b32.xlu0 %v317, 12
        %v570 = vpop.permute.xlu0 %569
        %571 = vrot.lane.b32.xlu0 %v318, 12
        %v572 = vpop.permute.xlu0 %571
        %573 = vrot.lane.b32.xlu0 %v319, 12
        %v574 = vpop.permute.xlu0 %573
        %575 = vrot.lane.b32.xlu0 %v320, 12
        %v576 = vpop.permute.xlu0 %575
        %577 = vrot.lane.b32.xlu0 %v321, 12
        %v578 = vpop.permute.xlu0 %577
        %579 = vrot.lane.b32.xlu0 %v322, 12
        %v580 = vpop.permute.xlu0 %579
        %581 = vrot.lane.b32.xlu0 %v323, 12
        %v582 = vpop.permute.xlu0 %581
        %615 = vrot.lane.b32.xlu0 %v324, 16
        %v616 = vpop.permute.xlu0 %615
        %617 = vrot.lane.b32.xlu0 %v325, 16
        %v618 = vpop.permute.xlu0 %617
        %619 = vrot.lane.b32.xlu0 %v326, 16
        %v620 = vpop.permute.xlu0 %619
        %621 = vrot.lane.b32.xlu0 %v327, 16
        %v622 = vpop.permute.xlu0 %621
        %623 = vrot.lane.b32.xlu0 %v328, 16
        %v624 = vpop.permute.xlu0 %623
        %625 = vrot.lane.b32.xlu0 %v329, 16
        %v626 = vpop.permute.xlu0 %625
        %627 = vrot.lane.b32.xlu0 %v330, 16
        %v628 = vpop.permute.xlu0 %627
        %629 = vrot.lane.b32.xlu0 %v331, 16
        %v630 = vpop.permute.xlu0 %629
        %631 = vrot.lane.b32.xlu0 %v332, 16
        %v632 = vpop.permute.xlu0 %631
        %633 = vrot.lane.b32.xlu0 %v333, 16
        %v634 = vpop.permute.xlu0 %633
        %635 = vrot.lane.b32.xlu0 %v334, 16
        %v636 = vpop.permute.xlu0 %635
        %637 = vrot.lane.b32.xlu0 %v335, 16
        %v638 = vpop.permute.xlu0 %637
        %639 = vrot.lane.b32.xlu0 %v336, 16
        %v640 = vpop.permute.xlu0 %639
        %641 = vrot.lane.b32.xlu0 %v337, 16
        %v642 = vpop.permute.xlu0 %641
        %643 = vrot.lane.b32.xlu0 %v338, 16
        %v644 = vpop.permute.xlu0 %643
        %645 = vrot.lane.b32.xlu0 %v339, 16
        %v646 = vpop.permute.xlu0 %645
        %679 = vrot.lane.b32.xlu0 %v340, 20
        %v680 = vpop.permute.xlu0 %679
        %681 = vrot.lane.b32.xlu0 %v341, 20
        %v682 = vpop.permute.xlu0 %681
        %683 = vrot.lane.b32.xlu0 %v342, 20
        %v684 = vpop.permute.xlu0 %683
        %685 = vrot.lane.b32.xlu0 %v343, 20
        %v686 = vpop.permute.xlu0 %685
        %687 = vrot.lane.b32.xlu0 %v344, 20
        %v688 = vpop.permute.xlu0 %687
        %689 = vrot.lane.b32.xlu0 %v345, 20
        %v690 = vpop.permute.xlu0 %689
        %691 = vrot.lane.b32.xlu0 %v346, 20
        %v692 = vpop.permute.xlu0 %691
        %693 = vrot.lane.b32.xlu0 %v347, 20
        %v694 = vpop.permute.xlu0 %693
        %695 = vrot.lane.b32.xlu0 %v348, 20
        %v696 = vpop.permute.xlu0 %695
        %697 = vrot.lane.b32.xlu0 %v349, 20
        %v698 = vpop.permute.xlu0 %697
        %699 = vrot.lane.b32.xlu0 %v350, 20
        %v700 = vpop.permute.xlu0 %699
        %701 = vrot.lane.b32.xlu0 %v351, 20
        %v702 = vpop.permute.xlu0 %701
        %703 = vrot.lane.b32.xlu0 %v352, 20
        %v704 = vpop.permute.xlu0 %703
        %705 = vrot.lane.b32.xlu0 %v353, 20
        %v706 = vpop.permute.xlu0 %705
        %707 = vrot.lane.b32.xlu0 %v354, 20
        %v708 = vpop.permute.xlu0 %707
        %709 = vrot.lane.b32.xlu0 %v355, 20
        %v710 = vpop.permute.xlu0 %709
        %743 = vrot.lane.b32.xlu0 %v359, 24
        %v744 = vpop.permute.xlu0 %743
        %745 = vrot.lane.b32.xlu0 %v360, 24
        %v746 = vpop.permute.xlu0 %745
        %747 = vrot.lane.b32.xlu0 %v361, 24
        %v748 = vpop.permute.xlu0 %747
        %749 = vrot.lane.b32.xlu0 %v362, 24
        %v750 = vpop.permute.xlu0 %749
        %751 = vrot.lane.b32.xlu0 %v363, 24
        %v752 = vpop.permute.xlu0 %751
        %753 = vrot.lane.b32.xlu0 %v364, 24
        %v754 = vpop.permute.xlu0 %753
        %755 = vrot.lane.b32.xlu0 %v365, 24
        %v756 = vpop.permute.xlu0 %755
        %757 = vrot.lane.b32.xlu0 %v366, 24
        %v758 = vpop.permute.xlu0 %757
        %759 = vrot.lane.b32.xlu0 %v367, 24
        %v760 = vpop.permute.xlu0 %759
        %761 = vrot.lane.b32.xlu0 %v368, 24
        %v762 = vpop.permute.xlu0 %761
        %763 = vrot.lane.b32.xlu0 %v369, 24
        %v764 = vpop.permute.xlu0 %763
        %765 = vrot.lane.b32.xlu0 %v370, 24
        %v766 = vpop.permute.xlu0 %765
        %767 = vrot.lane.b32.xlu0 %v371, 24
        %v768 = vpop.permute.xlu0 %767
        %769 = vrot.lane.b32.xlu0 %v372, 24
        %v770 = vpop.permute.xlu0 %769
        %771 = vrot.lane.b32.xlu0 %v373, 24
        %v772 = vpop.permute.xlu0 %771
        %773 = vrot.lane.b32.xlu0 %v374, 24
        %v774 = vpop.permute.xlu0 %773
        %807 = vrot.lane.b32.xlu0 %v375, 28
        %v808 = vpop.permute.xlu0 %807
        %809 = vrot.lane.b32.xlu0 %v376, 28
        %v810 = vpop.permute.xlu0 %809
        %811 = vrot.lane.b32.xlu0 %v377, 28
        %v812 = vpop.permute.xlu0 %811
        %813 = vrot.lane.b32.xlu0 %v378, 28
        %v814 = vpop.permute.xlu0 %813
        %815 = vrot.lane.b32.xlu0 %v379, 28
        %v816 = vpop.permute.xlu0 %815
        %817 = vrot.lane.b32.xlu0 %v380, 28
        %v818 = vpop.permute.xlu0 %817
        %819 = vrot.lane.b32.xlu0 %v381, 28
        %v820 = vpop.permute.xlu0 %819
        %821 = vrot.lane.b32.xlu0 %v382, 28
        %v822 = vpop.permute.xlu0 %821
        %823 = vrot.lane.b32.xlu0 %v383, 28
        %v824 = vpop.permute.xlu0 %823
        %825 = vrot.lane.b32.xlu0 %v384, 28
        %v826 = vpop.permute.xlu0 %825
        %827 = vrot.lane.b32.xlu0 %v385, 28
        %v828 = vpop.permute.xlu0 %827
        %829 = vrot.lane.b32.xlu0 %v386, 28
        %v830 = vpop.permute.xlu0 %829
        %831 = vrot.lane.b32.xlu0 %v387, 28
        %v832 = vpop.permute.xlu0 %831
        %833 = vrot.lane.b32.xlu0 %v388, 28
        %v834 = vpop.permute.xlu0 %833
        %835 = vrot.lane.b32.xlu0 %v389, 28
        %v836 = vpop.permute.xlu0 %835
        %837 = vrot.lane.b32.xlu0 %v390, 28
        %v838 = vpop.permute.xlu0 %837
        %871 = vrot.lane.b32.xlu0 %v391, 32
        %v872 = vpop.permute.xlu0 %871
        %873 = vrot.lane.b32.xlu0 %v392, 32
        %v874 = vpop.permute.xlu0 %873
        %875 = vrot.lane.b32.xlu0 %v393, 32
        %v876 = vpop.permute.xlu0 %875
        %877 = vrot.lane.b32.xlu0 %v394, 32
        %v878 = vpop.permute.xlu0 %877
        %879 = vrot.lane.b32.xlu0 %v395, 32
        %v880 = vpop.permute.xlu0 %879
        %881 = vrot.lane.b32.xlu0 %v396, 32
        %v882 = vpop.permute.xlu0 %881
        %883 = vrot.lane.b32.xlu0 %v397, 32
        %v884 = vpop.permute.xlu0 %883
        %885 = vrot.lane.b32.xlu0 %v398, 32
        %v886 = vpop.permute.xlu0 %885
        %887 = vrot.lane.b32.xlu0 %v399, 32
        %v888 = vpop.permute.xlu0 %887
        %889 = vrot.lane.b32.xlu0 %v400, 32
        %v890 = vpop.permute.xlu0 %889
        %891 = vrot.lane.b32.xlu0 %v401, 32
        %v892 = vpop.permute.xlu0 %891
        %893 = vrot.lane.b32.xlu0 %v402, 32
        %v894 = vpop.permute.xlu0 %893
        %895 = vrot.lane.b32.xlu0 %v403, 32
        %v896 = vpop.permute.xlu0 %895
        %897 = vrot.lane.b32.xlu0 %v404, 32
        %v898 = vpop.permute.xlu0 %897
        %899 = vrot.lane.b32.xlu0 %v405, 32
        %v900 = vpop.permute.xlu0 %899
        %901 = vrot.lane.b32.xlu0 %v406, 32
        %v902 = vpop.permute.xlu0 %901
        %vm919 = vcmask 31744
        %v920 = vsel %vm919, %v257, %v424
        %v921 = vsel %vm919, %v258, %v426
        %v922 = vsel %vm919, %v259, %v428
        %v923 = vsel %vm919, %v260, %v430
        %v924 = vsel %vm919, %v261, %v432
        %v925 = vsel %vm919, %v262, %v434
        %v926 = vsel %vm919, %v263, %v436
        %v927 = vsel %vm919, %v264, %v438
        %v928 = vsel %vm919, %v265, %v440
        %v929 = vsel %vm919, %v266, %v442
        %v930 = vsel %vm919, %v267, %v444
        %v931 = vsel %vm919, %v268, %v446
        %v932 = vsel %vm919, %v269, %v448
        %v933 = vsel %vm919, %v270, %v450
        %v934 = vsel %vm919, %v271, %v452
        %v935 = vsel %vm919, %v272, %v454
        %vm936 = vcmask 64512
        %v937 = vsel %vm936, %v920, %v488
        %v938 = vsel %vm936, %v921, %v490
        %v939 = vsel %vm936, %v922, %v492
        %v940 = vsel %vm936, %v923, %v494
        %v941 = vsel %vm936, %v924, %v496
        %v942 = vsel %vm936, %v925, %v498
        %v943 = vsel %vm936, %v926, %v500
        %v944 = vsel %vm936, %v927, %v502
        %v945 = vsel %vm936, %v928, %v504
        %v946 = vsel %vm936, %v929, %v506
        %v947 = vsel %vm936, %v930, %v508
        %v948 = vsel %vm936, %v931, %v510
        %v949 = vsel %vm936, %v932, %v512
        %v950 = vsel %vm936, %v933, %v514
        %v951 = vsel %vm936, %v934, %v516
        %v952 = vsel %vm936, %v935, %v518
        %vm953 = vcmask 97280
        %v954 = vsel %vm953, %v937, %v552
        %v955 = vsel %vm953, %v938, %v554
        %v956 = vsel %vm953, %v939, %v556
        %v957 = vsel %vm953, %v940, %v558
        %v958 = vsel %vm953, %v941, %v560
        %v959 = vsel %vm953, %v942, %v562
        %v960 = vsel %vm953, %v943, %v564
        %v961 = vsel %vm953, %v944, %v566
        %v962 = vsel %vm953, %v945, %v568
        %v963 = vsel %vm953, %v946, %v570
        %v964 = vsel %vm953, %v947, %v572
        %v965 = vsel %vm953, %v948, %v574
        %v966 = vsel %vm953, %v949, %v576
        %v967 = vsel %vm953, %v950, %v578
        %v968 = vsel %vm953, %v951, %v580
        %v969 = vsel %vm953, %v952, %v582
        %vm970 = vcmask 130048
        %v971 = vsel %vm970, %v954, %v616
        %v972 = vsel %vm970, %v955, %v618
        %v973 = vsel %vm970, %v956, %v620
        %v974 = vsel %vm970, %v957, %v622
        %v975 = vsel %vm970, %v958, %v624
        %v976 = vsel %vm970, %v959, %v626
        %v977 = vsel %vm970, %v960, %v628
        %v978 = vsel %vm970, %v961, %v630
        %v979 = vsel %vm970, %v962, %v632
        %v980 = vsel %vm970, %v963, %v634
        %v981 = vsel %vm970, %v964, %v636
        %v982 = vsel %vm970, %v965, %v638
        %v983 = vsel %vm970, %v966, %v640
        %v984 = vsel %vm970, %v967, %v642
        %v985 = vsel %vm970, %v968, %v644
        %v986 = vsel %vm970, %v969, %v646
        %vm987 = vcmask 162816
        %v988 = vsel %vm987, %v971, %v680
        %v989 = vsel %vm987, %v972, %v682
        %v990 = vsel %vm987, %v973, %v684
        %v991 = vsel %vm987, %v974, %v686
        %v992 = vsel %vm987, %v975, %v688
        %v993 = vsel %vm987, %v976, %v690
        %v994 = vsel %vm987, %v977, %v692
        %v995 = vsel %vm987, %v978, %v694
        %v996 = vsel %vm987, %v979, %v696
        %v997 = vsel %vm987, %v980, %v698
        %v998 = vsel %vm987, %v981, %v700
        %v999 = vsel %vm987, %v982, %v702
        %v1000 = vsel %vm987, %v983, %v704
        %v1001 = vsel %vm987, %v984, %v706
        %v1002 = vsel %vm987, %v985, %v708
        %v1003 = vsel %vm987, %v986, %v710
        %vm1004 = vcmask 195584
        %v1005 = vsel %vm1004, %v988, %v744
        %v1006 = vsel %vm1004, %v989, %v746
        %v1007 = vsel %vm1004, %v990, %v748
        %v1008 = vsel %vm1004, %v991, %v750
        %v1009 = vsel %vm1004, %v992, %v752
        %v1010 = vsel %vm1004, %v993, %v754
        %v1011 = vsel %vm1004, %v994, %v756
        %v1012 = vsel %vm1004, %v995, %v758
        %v1013 = vsel %vm1004, %v996, %v760
        %v1014 = vsel %vm1004, %v997, %v762
        %v1015 = vsel %vm1004, %v998, %v764
        %v1016 = vsel %vm1004, %v999, %v766
        %v1017 = vsel %vm1004, %v1000, %v768
        %v1018 = vsel %vm1004, %v1001, %v770
        %v1019 = vsel %vm1004, %v1002, %v772
        %v1020 = vsel %vm1004, %v1003, %v774
        %vm1021 = vcmask 228352
        %v1022 = vsel %vm1021, %v1005, %v808
        %v1023 = vsel %vm1021, %v1006, %v810
        %v1024 = vsel %vm1021, %v1007, %v812
        %v1025 = vsel %vm1021, %v1008, %v814
        %v1026 = vsel %vm1021, %v1009, %v816
        %v1027 = vsel %vm1021, %v1010, %v818
        %v1028 = vsel %vm1021, %v1011, %v820
        %v1029 = vsel %vm1021, %v1012, %v822
        %v1030 = vsel %vm1021, %v1013, %v824
        %v1031 = vsel %vm1021, %v1014, %v826
        %v1032 = vsel %vm1021, %v1015, %v828
        %v1033 = vsel %vm1021, %v1016, %v830
        %v1034 = vsel %vm1021, %v1017, %v832
        %v1035 = vsel %vm1021, %v1018, %v834
        %v1036 = vsel %vm1021, %v1019, %v836
        %v1037 = vsel %vm1021, %v1020, %v838
        %vm1038 = vcmask 261120
        %v1039 = vsel %vm1038, %v1022, %v872
        %v1040 = vsel %vm1038, %v1023, %v874
        %v1041 = vsel %vm1038, %v1024, %v876
        %v1042 = vsel %vm1038, %v1025, %v878
        %v1043 = vsel %vm1038, %v1026, %v880
        %v1044 = vsel %vm1038, %v1027, %v882
        %v1045 = vsel %vm1038, %v1028, %v884
        %v1046 = vsel %vm1038, %v1029, %v886
        %v1047 = vsel %vm1038, %v1030, %v888
        %v1048 = vsel %vm1038, %v1031, %v890
        %v1049 = vsel %vm1038, %v1032, %v892
        %v1050 = vsel %vm1038, %v1033, %v894
        %v1051 = vsel %vm1038, %v1034, %v896
        %v1052 = vsel %vm1038, %v1035, %v898
        %v1053 = vsel %vm1038, %v1036, %v900
        %v1054 = vsel %vm1038, %v1037, %v902
        %v1055 = vld [vmem:[#allocation5] sm:$0xff]
        %v1056 = vld [vmem:[#allocation5 + $0x8] sm:$0xff]
        %v1057 = vld [vmem:[#allocation5 + $0x10] sm:$0xff]
        %v1058 = vld [vmem:[#allocation5 + $0x18] sm:$0xff]
        %v1059 = vld [vmem:[#allocation5 + $0x20] sm:$0xf]
        %v1060 = vld [vmem:[#allocation7] sm:$0x1]
        %v1062 = vlaneseq
        %v1063 = vshrl.u32 %v1062, 7
        %v1064 = vsub.s32 0, %v1063
        %v1065 = vrot.slane %v1060, %v1064
        %vm1067 = vcmask 293888
        %v1069 = vsel %vm1067, %v1039, 0
        %v1072 = vsel %vm1067, %v1040, 0
        %v1075 = vsel %vm1067, %v1041, 0
        %v1078 = vsel %vm1067, %v1042, 0
        %v1081 = vsel %vm1067, %v1043, 0
        %v1084 = vsel %vm1067, %v1044, 0
        %v1087 = vsel %vm1067, %v1045, 0
        %v1090 = vsel %vm1067, %v1046, 0
        %v1093 = vsel %vm1067, %v1047, 0
        %v1096 = vsel %vm1067, %v1048, 0
        %v1099 = vsel %vm1067, %v1049, 0
        %v1102 = vsel %vm1067, %v1050, 0
        %v1105 = vsel %vm1067, %v1051, 0
        %v1108 = vsel %vm1067, %v1052, 0
        %v1111 = vsel %vm1067, %v1053, 0
        %v1114 = vsel %vm1067, %v1054, 0
        %vm1116 = vcmask 1043456
        %v1118 = vsel %vm1116, %v1059, 0
        %1120 = vmatprep.subr.mxu0 0.0
        %1121 = vmatpush1.msra.mxu0 %v1055
        %1122 = vmatprep.subr.mxu0 0.0
        %1123 = vmatpush1.msra.mxu0 %v1056
        %1124 = vmatprep.subr.mxu0 0.0
        %1125 = vmatpush1.msra.mxu0 %v1057
        %1126 = vmatprep.subr.mxu0 0.0
        %1127 = vmatpush1.msra.mxu0 %v1058
        %1128 = vmatprep.subr.mxu0 0.0
        %1129 = vmatpush1.msra.mxu0 %v1118
        %1130 = vmatprep.subr.mxu0 0.0
        %1131 = vmatpush1.msra.mxu0 0.0
        %1132 = vmatprep.subr.mxu0 0.0
        %1133 = vmatpush1.msra.mxu0 0.0
        %1134 = vmatprep.subr.mxu0 0.0
        %1135 = vmatpush1.msra.mxu0 0.0
        %1136 = vmatprep.subr.mxu0 0.0
        %1137 = vmatpush1.msra.mxu0 0.0
        %1138 = vmatprep.subr.mxu0 0.0
        %1139 = vmatpush1.msra.mxu0 0.0
        %1140 = vmatprep.subr.mxu0 0.0
        %1141 = vmatpush1.msra.mxu0 0.0
        %1142 = vmatprep.subr.mxu0 0.0
        %1143 = vmatpush1.msra.mxu0 0.0
        %1144 = vmatprep.subr.mxu0 0.0
        %1145 = vmatpush1.msra.mxu0 0.0
        %1146 = vmatprep.subr.mxu0 0.0
        %1147 = vmatpush1.msra.mxu0 0.0
        %1148 = vmatprep.subr.mxu0 0.0
        %1149 = vmatpush1.msra.mxu0 0.0
        %1150 = vmatprep.subr.mxu0 0.0
        %1151 = vmatpush1.msra.mxu0 0.0
        %1152 = vmatprep.subr.mxu0 0.0
        %1153 = vmatpush1.msra.mxu0 0.0
        %1154 = vmatprep.subr.mxu0 0.0
        %1155 = vmatpush1.msra.mxu0 0.0
        %1156 = vmatprep.subr.mxu0 0.0
        %1157 = vmatpush1.msra.mxu0 0.0
        %1158 = vmatprep.subr.mxu0 0.0
        %1159 = vmatpush1.msra.mxu0 0.0
        %1160 = vmatprep.subr.mxu0 0.0
        %1161 = vmatpush1.msra.mxu0 0.0
        %1162 = vmatprep.subr.mxu0 0.0
        %1163 = vmatpush1.msra.mxu0 0.0
        %1164 = vmatprep.subr.mxu0 0.0
        %1165 = vmatpush1.msra.mxu0 0.0
        %1166 = vmatprep.subr.mxu0 0.0
        %1167 = vmatpush1.msra.mxu0 0.0
        %1168 = vmatprep.subr.mxu0 0.0
        %1169 = vmatpush1.msra.mxu0 0.0
        %1170 = vmatprep.subr.mxu0 0.0
        %1171 = vmatpush1.msra.mxu0 0.0
        %1172 = vmatprep.subr.mxu0 0.0
        %1173 = vmatpush1.msra.mxu0 0.0
        %1174 = vmatprep.subr.mxu0 0.0
        %1175 = vmatpush1.msra.mxu0 0.0
        %1176 = vmatprep.subr.mxu0 0.0
        %1177 = vmatpush1.msra.mxu0 0.0
        %1178 = vmatprep.subr.mxu0 0.0
        %1179 = vmatpush1.msra.mxu0 0.0
        %1180 = vmatprep.subr.mxu0 0.0
        %1181 = vmatpush1.msra.mxu0 0.0
        %1182 = vmatprep.subr.mxu0 0.0
        %1183 = vmatpush1.msra.mxu0 0.0
        %1184 = vmatprep.mubr.f32.mxu0 0.0
        %1185 = vmatmul.mubr.f32.gmra.mrb[0].mxu0 %v1069
        %v1186 = vpop.f32.mrb[0].mxu0
        %v1187 = vadd.f32 %v1065, %v1186
        %v1188 = vpop.f32.mrb[0].mxu0
        %1189 = vmatprep.mubr.f32.mxu0 0.0
        %1190 = vmatmul.mubr.f32.gmra.mrb[0].mxu0 %v1072
        %v1191 = vpop.f32.mrb[0].mxu0
        %v1192 = vadd.f32 %v1065, %v1191
        %v1193 = vpop.f32.mrb[0].mxu0
        %1194 = vmatprep.mubr.f32.mxu0 0.0
        %1195 = vmatmul.mubr.f32.gmra.mrb[0].mxu0 %v1075
        %v1196 = vpop.f32.mrb[0].mxu0
        %v1197 = vadd.f32 %v1065, %v1196
        %v1198 = vpop.f32.mrb[0].mxu0
        %1199 = vmatprep.mubr.f32.mxu0 0.0
        %1200 = vmatmul.mubr.f32.gmra.mrb[0].mxu0 %v1078
        %v1201 = vpop.f32.mrb[0].mxu0
        %v1202 = vadd.f32 %v1065, %v1201
        %v1203 = vpop.f32.mrb[0].mxu0
        %1204 = vmatprep.mubr.f32.mxu0 0.0
        %1205 = vmatmul.mubr.f32.gmra.mrb[0].mxu0 %v1081
        %v1206 = vpop.f32.mrb[0].mxu0
        %v1207 = vadd.f32 %v1065, %v1206
        %v1208 = vpop.f32.mrb[0].mxu0
        %1209 = vmatprep.mubr.f32.mxu0 0.0
        %1210 = vmatmul.mubr.f32.gmra.mrb[0].mxu0 %v1084
        %v1211 = vpop.f32.mrb[0].mxu0
        %v1212 = vadd.f32 %v1065, %v1211
        %v1213 = vpop.f32.mrb[0].mxu0
        %1214 = vmatprep.mubr.f32.mxu0 0.0
        %1215 = vmatmul.mubr.f32.gmra.mrb[0].mxu0 %v1087
        %v1216 = vpop.f32.mrb[0].mxu0
        %v1217 = vadd.f32 %v1065, %v1216
        %v1218 = vpop.f32.mrb[0].mxu0
        %1219 = vmatprep.mubr.f32.mxu0 0.0
        %1220 = vmatmul.mubr.f32.gmra.mrb[0].mxu0 %v1090
        %v1221 = vpop.f32.mrb[0].mxu0
        %v1222 = vadd.f32 %v1065, %v1221
        %v1223 = vpop.f32.mrb[0].mxu0
        %1224 = vmatprep.mubr.f32.mxu0 0.0
        %1225 = vmatmul.mubr.f32.gmra.mrb[0].mxu0 %v1093
        %v1226 = vpop.f32.mrb[0].mxu0
        %v1227 = vadd.f32 %v1065, %v1226
        %v1228 = vpop.f32.mrb[0].mxu0
        %1229 = vmatprep.mubr.f32.mxu0 0.0
        %1230 = vmatmul.mubr.f32.gmra.mrb[0].mxu0 %v1096
        %v1231 = vpop.f32.mrb[0].mxu0
        %v1232 = vadd.f32 %v1065, %v1231
        %v1233 = vpop.f32.mrb[0].mxu0
        %1234 = vmatprep.mubr.f32.mxu0 0.0
        %1235 = vmatmul.mubr.f32.gmra.mrb[0].mxu0 %v1099
        %v1236 = vpop.f32.mrb[0].mxu0
        %v1237 = vadd.f32 %v1065, %v1236
        %v1238 = vpop.f32.mrb[0].mxu0
        %1239 = vmatprep.mubr.f32.mxu0 0.0
        %1240 = vmatmul.mubr.f32.gmra.mrb[0].mxu0 %v1102
        %v1241 = vpop.f32.mrb[0].mxu0
        %v1242 = vadd.f32 %v1065, %v1241
        %v1243 = vpop.f32.mrb[0].mxu0
        %1244 = vmatprep.mubr.f32.mxu0 0.0
        %1245 = vmatmul.mubr.f32.gmra.mrb[0].mxu0 %v1105
        %v1246 = vpop.f32.mrb[0].mxu0
        %v1247 = vadd.f32 %v1065, %v1246
        %v1248 = vpop.f32.mrb[0].mxu0
        %1249 = vmatprep.mubr.f32.mxu0 0.0
        %1250 = vmatmul.mubr.f32.gmra.mrb[0].mxu0 %v1108
        %v1251 = vpop.f32.mrb[0].mxu0
        %v1252 = vadd.f32 %v1065, %v1251
        %v1253 = vpop.f32.mrb[0].mxu0
        %1254 = vmatprep.mubr.f32.mxu0 0.0
        %1255 = vmatmul.mubr.f32.gmra.mrb[0].mxu0 %v1111
        %v1256 = vpop.f32.mrb[0].mxu0
        %v1257 = vadd.f32 %v1065, %v1256
        %v1258 = vpop.f32.mrb[0].mxu0
        %1259 = vmatprep.mubr.f32.mxu0 0.0
        %1260 = vmatmul.mubr.f32.gmra.mrb[0].mxu0 %v1114
        %v1261 = vpop.f32.mrb[0].mxu0
        %v1262 = vadd.f32 %v1065, %v1261
        %v1263 = vpop.f32.mrb[0].mxu0
        %1264 = vdwg.mxu0
        %v1265 = vxor.u32 %v1187, 2147483648
        %v1266 = vxor.u32 %v1192, 2147483648
        %v1267 = vxor.u32 %v1197, 2147483648
        %v1268 = vxor.u32 %v1202, 2147483648
        %v1269 = vxor.u32 %v1207, 2147483648
        %v1270 = vxor.u32 %v1212, 2147483648
        %v1271 = vxor.u32 %v1217, 2147483648
        %v1272 = vxor.u32 %v1222, 2147483648
        %v1273 = vxor.u32 %v1227, 2147483648
        %v1274 = vxor.u32 %v1232, 2147483648
        %v1275 = vxor.u32 %v1237, 2147483648
        %v1276 = vxor.u32 %v1242, 2147483648
        %v1277 = vxor.u32 %v1247, 2147483648
        %v1278 = vxor.u32 %v1252, 2147483648
        %v1279 = vxor.u32 %v1257, 2147483648
        %v1280 = vxor.u32 %v1262, 2147483648
        %v1281 = vmul.f32 %v1265, 1.442695
        %v1282 = vpow.pop %v1281
        %v1283 = vmul.f32 %v1266, 1.442695
        %v1284 = vpow.pop %v1283
        %v1285 = vmul.f32 %v1267, 1.442695
        %v1286 = vpow.pop %v1285
        %v1287 = vmul.f32 %v1268, 1.442695
        %v1288 = vpow.pop %v1287
        %v1289 = vmul.f32 %v1269, 1.442695
        %v1290 = vpow.pop %v1289
        %v1291 = vmul.f32 %v1270, 1.442695
        %v1292 = vpow.pop %v1291
        %v1293 = vmul.f32 %v1271, 1.442695
        %v1294 = vpow.pop %v1293
        %v1295 = vmul.f32 %v1272, 1.442695
        %v1296 = vpow.pop %v1295
        %v1297 = vmul.f32 %v1273, 1.442695
        %v1298 = vpow.pop %v1297
        %v1299 = vmul.f32 %v1274, 1.442695
        %v1300 = vpow.pop %v1299
        %v1301 = vmul.f32 %v1275, 1.442695
        %v1302 = vpow.pop %v1301
        %v1303 = vmul.f32 %v1276, 1.442695
        %v1304 = vpow.pop %v1303
        %v1305 = vmul.f32 %v1277, 1.442695
        %v1306 = vpow.pop %v1305
        %v1307 = vmul.f32 %v1278, 1.442695
        %v1308 = vpow.pop %v1307
        %v1309 = vmul.f32 %v1279, 1.442695
        %v1310 = vpow.pop %v1309
        %v1311 = vmul.f32 %v1280, 1.442695
        %v1312 = vpow.pop %v1311
        %v1313 = vadd.f32 %v1282, 1.0
        %v1314 = vadd.f32 %v1284, 1.0
        %v1315 = vadd.f32 %v1286, 1.0
        %v1316 = vadd.f32 %v1288, 1.0
        %v1317 = vadd.f32 %v1290, 1.0
        %v1318 = vadd.f32 %v1292, 1.0
        %v1319 = vadd.f32 %v1294, 1.0
        %v1320 = vadd.f32 %v1296, 1.0
        %v1321 = vadd.f32 %v1298, 1.0
        %v1322 = vadd.f32 %v1300, 1.0
        %v1323 = vadd.f32 %v1302, 1.0
        %v1324 = vadd.f32 %v1304, 1.0
        %v1325 = vadd.f32 %v1306, 1.0
        %v1326 = vadd.f32 %v1308, 1.0
        %v1327 = vadd.f32 %v1310, 1.0
        %v1328 = vadd.f32 %v1312, 1.0
        %v1329 = vrcp.pop %v1313
        %v1330 = vmul.f32 1.0, %v1329
        %v1331 = vrcp.pop %v1314
        %v1332 = vmul.f32 1.0, %v1331
        %v1333 = vrcp.pop %v1315
        %v1334 = vmul.f32 1.0, %v1333
        %v1335 = vrcp.pop %v1316
        %v1336 = vmul.f32 1.0, %v1335
        %v1337 = vrcp.pop %v1317
        %v1338 = vmul.f32 1.0, %v1337
        %v1339 = vrcp.pop %v1318
        %v1340 = vmul.f32 1.0, %v1339
        %v1341 = vrcp.pop %v1319
        %v1342 = vmul.f32 1.0, %v1341
        %v1343 = vrcp.pop %v1320
        %v1344 = vmul.f32 1.0, %v1343
        %v1345 = vrcp.pop %v1321
        %v1346 = vmul.f32 1.0, %v1345
        %v1347 = vrcp.pop %v1322
        %v1348 = vmul.f32 1.0, %v1347
        %v1349 = vrcp.pop %v1323
        %v1350 = vmul.f32 1.0, %v1349
        %v1351 = vrcp.pop %v1324
        %v1352 = vmul.f32 1.0, %v1351
        %v1353 = vrcp.pop %v1325
        %v1354 = vmul.f32 1.0, %v1353
        %v1355 = vrcp.pop %v1326
        %v1356 = vmul.f32 1.0, %v1355
        %v1357 = vrcp.pop %v1327
        %v1358 = vmul.f32 1.0, %v1357
        %v1359 = vrcp.pop %v1328
        %v1360 = vmul.f32 1.0, %v1359
        %v1361 = vmul.f32 %v1187, %v1330
        %v1362 = vmul.f32 %v1192, %v1332
        %v1363 = vmul.f32 %v1197, %v1334
        %v1364 = vmul.f32 %v1202, %v1336
        %v1365 = vmul.f32 %v1207, %v1338
        %v1366 = vmul.f32 %v1212, %v1340
        %v1367 = vmul.f32 %v1217, %v1342
        %v1368 = vmul.f32 %v1222, %v1344
        %v1369 = vmul.f32 %v1227, %v1346
        %v1370 = vmul.f32 %v1232, %v1348
        %v1371 = vmul.f32 %v1237, %v1350
        %v1372 = vmul.f32 %v1242, %v1352
        %v1373 = vmul.f32 %v1247, %v1354
        %v1374 = vmul.f32 %v1252, %v1356
        %v1375 = vmul.f32 %v1257, %v1358
        %v1376 = vmul.f32 %v1262, %v1360
        %1377 = vst.msk [vmem:[%s252] sm:$0xff] %vm936, %v1361
        %1378 = vst.msk [vmem:[%s252 + $0x8] sm:$0xff] %vm936, %v1362
        %1379 = vst.msk [vmem:[%s252 + $0x10] sm:$0xff] %vm936, %v1363
        %1380 = vst.msk [vmem:[%s252 + $0x18] sm:$0xff] %vm936, %v1364
        %1381 = vst.msk [vmem:[%s252 + $0x20] sm:$0xff] %vm936, %v1365
        %1382 = vst.msk [vmem:[%s252 + $0x28] sm:$0xff] %vm936, %v1366
        %1383 = vst.msk [vmem:[%s252 + $0x30] sm:$0xff] %vm936, %v1367
        %1384 = vst.msk [vmem:[%s252 + $0x38] sm:$0xff] %vm936, %v1368
        %1385 = vst.msk [vmem:[%s252 + $0x40] sm:$0xff] %vm936, %v1369
        %1386 = vst.msk [vmem:[%s252 + $0x48] sm:$0xff] %vm936, %v1370
        %1387 = vst.msk [vmem:[%s252 + $0x50] sm:$0xff] %vm936, %v1371
        %1388 = vst.msk [vmem:[%s252 + $0x58] sm:$0xff] %vm936, %v1372
        %1389 = vst.msk [vmem:[%s252 + $0x60] sm:$0xff] %vm936, %v1373
        %1390 = vst.msk [vmem:[%s252 + $0x68] sm:$0xff] %vm936, %v1374
        %1391 = vst.msk [vmem:[%s252 + $0x70] sm:$0xff] %vm936, %v1375
        %1392 = vst.msk [vmem:[%s252 + $0x78] sm:$0xff] %vm936, %v1376
        %s1393 = sand.u32 %s130, 1
        %s1394 = scalar_lea.sflag [#allocation4], %s1393
        %s1395 = sand.u32 %s130, 1
        %s1396 = smul.addr %s1395, 128
        %s1397 = scalar_lea.vmem [#allocation8], %s1396
        // Predicated region
        $region45: #{tpu_custom_call.1} parent=31 // pred_check
          %p1398 = pneg %p140
        $region46: #{tpu_custom_call.1} parent=31 // pred_check_branch
          %1400 = sbr.rel (%p1398) target = $region48
        $region47: #{tpu_custom_call.1} parent=31 // pred_region
          %s1401 = smul.u32 16, %s28
          %s1403 = ssub.s32 2048, 2048
          %1404 = vsyncadd %s1394, %s1403
          %s1405 = sadd.s32 %s27, %s1401
          %s1406 = smul.addr %s26, 32
          %s1407 = sadd.s32 %s1405, %s1406
          %s1408 = smul.addr %s1407, 128
          %s1409 = scalar_lea.hbm %s3, %s1408
          %s1410 = sshll.u32 %s1397, 4
          %s1411 = int_to_ptr.vmem [resolvable:$true] %s1410
          %1416 = dma.vmem_to_hbm [thread:$0]  %s1411, 2048, %s1409, %s1394, 128, 128, 8
        $region48: #{tpu_custom_call.1} parent=31 // pred_fallthru
          _
      $region32: #{tpu_custom_call.1} parent=5 // pred_fallthru
        _
      %p1417 = scmp.le.s32.totalorder 2, %s16
      // Predicated region
      $region49: #{tpu_custom_call.1} parent=5 // pred_check
        %p1418 = pneg %p1417
      $region50: #{tpu_custom_call.1} parent=5 // pred_check_branch
        %1420 = sbr.rel (%p1418) target = $region52
      $region51: #{tpu_custom_call.1} parent=5 // pred_region
        %s1421 = ssub.s32 %s16, 2
        // Predicated region
        $region53: #{tpu_custom_call.1} parent=51 // pred_check
          %p1422 = pneg %p146
        $region54: #{tpu_custom_call.1} parent=51 // pred_check_branch
          %1424 = sbr.rel (%p1422) target = $region56
        $region55: #{tpu_custom_call.1} parent=51 // pred_region
          %s1425 = sand.u32 %s131, 1
          %s1426 = scalar_lea.sflag [#allocation4], %s1425
          %s1427 = sand.u32 %s131, 1
          %s1428 = smul.addr %s1427, 128
          %s1429 = scalar_lea.vmem [#allocation8], %s1428
          %1430 = dma.done %s1426, 2048
        $region56: #{tpu_custom_call.1} parent=51 // pred_fallthru
          _
      $region52: #{tpu_custom_call.1} parent=5 // pred_fallthru
        _
    $region6: #{tpu_custom_call.1} parent=1 // loop_footer
      %s20 = sadd.s32 1, %s16
    $region7: #{tpu_custom_call.1} parent=1 // loop_footer_branch
      %15 = sbr.rel target = $region3
    $region8: #{tpu_custom_call.1} parent=1 // loop_exit
      _
    %1431 = vsyncpa [#allocation3], 1
    %s1432 = scalar_lea.sflag [#allocation3], 1
    %1433 = vsyncpa %s1432, 1
    %1434 = vsyncpa [#allocation6], 1
    %1435 = vsyncpa [#allocation4], 1
    %s1436 = scalar_lea.sflag [#allocation4], 1
    %1437 = vsyncpa %s1436, 1

</llo_original>
